<compile_context>
chip_gen: v6e
topology: v6e:2x2x1
jax: 0.10.0
libtpu: 0.0.40
codegen_flags: <defaults>
</compile_context>

<pallas_src>
import functools

import jax
import jax.numpy as jnp
from jax.experimental import pallas as pl
from jax.experimental.pallas import tpu as pltpu

EPS = 1e-5
MOMENTUM = 0.9


# ----------------------------------------------------------------------------
# VMEM sizing (re-derived per chip: v5e/v6e 128 MiB, v7x 64 MiB physical).
# ----------------------------------------------------------------------------
def _vmem_limit_bytes():
    cap = 64 << 20
    try:
        info = pltpu.get_tpu_info()
        cap = int(getattr(info, "vmem_capacity_bytes", cap)) or cap
    except Exception:
        pass
    # Use at most half the physical VMEM (and never more than 48 MiB) so
    # double-buffered pipelines keep comfortable headroom on every generation.
    return min(cap // 2, 48 << 20)


# ----------------------------------------------------------------------------
# Fused single-pass kernel: x resident in VMEM -> 2x HBM traffic instead of 3x.
# ----------------------------------------------------------------------------
def _bn_fused_kernel(x_ref, gamma_ref, beta_ref, mm_ref, mv_ref,
                     y_ref, new_mm_ref, new_mv_ref, *, eps, momentum):
    x = x_ref[...].astype(jnp.float32)                      # (N, C, HW)
    mean = jnp.mean(x, axis=(0, 2), keepdims=True)          # (1, C, 1)
    # x is resident, so use the centered (cancellation-free) variance.
    var = jnp.mean((x - mean) ** 2, axis=(0, 2), keepdims=True)

    gamma = gamma_ref[...].astype(jnp.float32)[None, :, :]  # (1, C, 1)
    beta = beta_ref[...].astype(jnp.float32)[None, :, :]
    scale = gamma * jax.lax.rsqrt(var + eps)
    shift = beta - mean * scale
    y_ref[...] = (x * scale + shift).astype(y_ref.dtype)

    new_mm_ref[...] = (momentum * mm_ref[...].astype(jnp.float32)
                       + (1.0 - momentum) * mean[0]).astype(new_mm_ref.dtype)
    new_mv_ref[...] = (momentum * mv_ref[...].astype(jnp.float32)
                       + (1.0 - momentum) * var[0]).astype(new_mv_ref.dtype)


def _batch_norm_fused(x3d, gamma_c, beta_c, mm_c, mv_c, eps, momentum,
                      vmem_limit):
    N, C, HW = x3d.shape
    kernel = functools.partial(_bn_fused_kernel, eps=eps, momentum=momentum)
    return pl.pallas_call(
        kernel,
        out_shape=(jax.ShapeDtypeStruct((N, C, HW), x3d.dtype),
                   jax.ShapeDtypeStruct((C, 1), mm_c.dtype),
                   jax.ShapeDtypeStruct((C, 1), mv_c.dtype)),
        compiler_params=pltpu.CompilerParams(vmem_limit_bytes=vmem_limit),
    )(x3d, gamma_c, beta_c, mm_c, mv_c)


# ----------------------------------------------------------------------------
# Tiled two-pass path, (N*C, HW) row layout.
# ----------------------------------------------------------------------------
def _bn_rowstats_kernel(x_ref, psum_ref, psq_ref):
    """Per-row-tile partial sum / sum-of-squares, accumulated along the HW grid
    axis only, so the row-tile axis can be 'parallel' (v7x megacore)."""
    @pl.when(pl.program_id(1) == 0)
    def _():
        psum_ref[...] = jnp.zeros_like(psum_ref)
        psq_ref[...] = jnp.zeros_like(psq_ref)

    x = x_ref[...].astype(jnp.float32)                      # (tr, thw)
    psum_ref[...] += jnp.sum(x, axis=1, keepdims=True)      # (tr, 1)
    psq_ref[...] += jnp.sum(x * x, axis=1, keepdims=True)


def _bn_rownorm_kernel(x_ref, scale_ref, shift_ref, y_ref):
    """y = x * scale + shift with per-row (tr, 1) scale/shift."""
    x = x_ref[...].astype(jnp.float32)                      # (tr, thw)
    y_ref[...] = (x * scale_ref[...] + shift_ref[...]).astype(y_ref.dtype)


def _pick_tiles(rows, hw, itemsize, block_budget):
    # Lane (last-dim) tile: prefer the full HW extent so each DMA segment is
    # one long contiguous row (long HBM bursts matter most on v7x).
    # TODO(synk): for HW < 128 (e.g. 7x7 late-ResNet maps) a (N, C*HW)
    # re-layout with repeated per-channel params would keep stores lane-dense.
    if hw % 128 != 0 or 8 * hw * itemsize <= block_budget:
        thw = hw
    else:
        thw = 128
        for cand in (8192, 4096, 2048, 1024, 512, 256):
            if hw % cand == 0 and 8 * cand * itemsize <= block_budget:
                thw = cand
                break
    # Row (sublane) tile: largest multiple of 8 that divides rows and fits the
    # block budget; fall back to the full row extent.
    tr = rows
    if rows % 8 == 0 and rows * thw * itemsize > block_budget:
        best = 8
        t = 8
        limit = min(rows, 8192)
        while t <= limit:
            if rows % t == 0 and t * thw * itemsize <= block_budget:
                best = t
            t += 8
        tr = best
    return tr, thw


def _batch_norm_tiled(x2d, gamma, beta, moving_mean, moving_var,
                      N, C, HW, eps, momentum, vmem_limit,
                      tile_rows=None, tile_hw=None):
    rows = N * C
    itemsize = jnp.dtype(x2d.dtype).itemsize
    block_budget = vmem_limit // 8   # pass 2 double-buffers in + out blocks
    tr, thw = _pick_tiles(rows, HW, itemsize, block_budget)
    if tile_rows is not None:
        tr = tile_rows
    if tile_hw is not None:
        thw = tile_hw
    assert rows % tr == 0 and HW % thw == 0
    grid = (rows // tr, HW // thw)

    x_spec = pl.BlockSpec((tr, thw), lambda i, j: (i, j))
    col_spec = pl.BlockSpec((tr, 1), lambda i, j: (i, 0))

    # ---- Pass 1: per-row partial sums (f32 accumulation). ----
    psum, psq = pl.pallas_call(
        _bn_rowstats_kernel,
        out_shape=(jax.ShapeDtypeStruct((rows, 1), jnp.float32),
                   jax.ShapeDtypeStruct((rows, 1), jnp.float32)),
        grid=grid,
        in_specs=[x_spec],
        out_specs=(col_spec, col_spec),
        compiler_params=pltpu.CompilerParams(
            dimension_semantics=("parallel", "arbitrary"),
            vmem_limit_bytes=vmem_limit),
    )(x2d)

    # Tiny epilogue: fold per-row partials into per-channel stats.
    count = jnp.float32(N * HW)
    sum_c = jnp.sum(psum.reshape(N, C), axis=0)
    sq_c = jnp.sum(psq.reshape(N, C), axis=0)
    mean_c = sum_c / count
    # Biased variance (matches the reference helper).  Clamp guards the tiny
    # negative values E[x^2]-mean^2 can produce from f32 cancellation.
    # TODO(synk): centered/Kahan accumulation if bf16 inputs with mean >> std
    # ever need tighter accuracy on this (large-x) path.
    var_c = jnp.maximum(sq_c / count - mean_c * mean_c, 0.0)

    inv_std = jax.lax.rsqrt(var_c + eps)
    scale_c = gamma.reshape(C).astype(jnp.float32) * inv_std
    shift_c = beta.reshape(C).astype(jnp.float32) - mean_c * scale_c

    # Per-row scale/shift: row r = n*C + c uses channel c.
    scale_rows = jnp.tile(scale_c, N).reshape(rows, 1)
    shift_rows = jnp.tile(shift_c, N).reshape(rows, 1)

    # ---- Pass 2: normalize; fully parallel tiles (both TCs on v7x). ----
    y2d = pl.pallas_call(
        _bn_rownorm_kernel,
        out_shape=jax.ShapeDtypeStruct((rows, HW), x2d.dtype),
        grid=grid,
        in_specs=[x_spec, col_spec, col_spec],
        out_specs=x_spec,
        compiler_params=pltpu.CompilerParams(
            dimension_semantics=("parallel", "parallel"),
            vmem_limit_bytes=vmem_limit),
    )(x2d, scale_rows, shift_rows)

    new_mm = (momentum * moving_mean.astype(jnp.float32)
              + (1.0 - momentum) * mean_c.reshape(1, C, 1, 1)
              ).astype(moving_mean.dtype)
    new_mv = (momentum * moving_var.astype(jnp.float32)
              + (1.0 - momentum) * var_c.reshape(1, C, 1, 1)
              ).astype(moving_var.dtype)
    return y2d, new_mm, new_mv


# ----------------------------------------------------------------------------
# Public wrapper.
# ----------------------------------------------------------------------------
def batch_norm_pallas(x_nchw, gamma, beta, moving_mean, moving_var,
                      eps=EPS, momentum=MOMENTUM, *,
                      force_tiled=False, tile_rows=None, tile_hw=None):
    """Training-mode BatchNorm for 4-D NCHW input.

    gamma/beta/moving_mean/moving_var have shape (1, C, 1, 1).
    Returns (Y in NCHW, new_moving_mean, new_moving_var).
    """
    N, C, H, W = x_nchw.shape
    HW = H * W
    vmem_limit = _vmem_limit_bytes()

    # Fused single-pass path when the f32 working set comfortably fits VMEM.
    fused_working_set = 6 * N * C * HW * 4
    if not force_tiled and fused_working_set <= vmem_limit:
        x3d = x_nchw.reshape(N, C, HW)          # free reshape, NCHW-native
        y3d, nmm, nmv = _batch_norm_fused(
            x3d,
            gamma.reshape(C, 1), beta.reshape(C, 1),
            moving_mean.reshape(C, 1), moving_var.reshape(C, 1),
            eps, momentum, vmem_limit)
        return (y3d.reshape(N, C, H, W),
                nmm.reshape(1, C, 1, 1),
                nmv.reshape(1, C, 1, 1))

    # Tiled two-pass path, (N*C, HW) row layout (free reshape).
    x2d = x_nchw.reshape(N * C, HW)
    y2d, new_mm, new_mv = _batch_norm_tiled(
        x2d, gamma, beta, moving_mean, moving_var,
        N, C, HW, eps, momentum, vmem_limit,
        tile_rows=tile_rows, tile_hw=tile_hw)
    return y2d.reshape(N, C, H, W), new_mm, new_mv


def batch_norm_ref(x, gamma, beta, moving_mean, moving_var,
                   eps=EPS, momentum=MOMENTUM):
    """Pure-JAX reference mirroring the PyTorch training-mode branch."""
    mean = jnp.mean(x, axis=(0, 2, 3), keepdims=True)
    var = jnp.mean((x - mean) ** 2, axis=(0, 2, 3), keepdims=True)
    x_hat = (x - mean) / jnp.sqrt(var + eps)
    y = gamma * x_hat + beta
    new_mm = momentum * moving_mean + (1.0 - momentum) * mean
    new_mv = momentum * moving_var + (1.0 - momentum) * var
    return y, new_mm, new_mv


if __name__ == "__main__":
    # Module: BatchNorm(num_features=4, num_dims=4); input x: (2, 4, 16, 16).
    N, C, H, W = 2, 4, 16, 16
    key = jax.random.PRNGKey(0)
    x = jax.random.uniform(key, (N, C, H, W), dtype=jnp.float32)

    # Deterministic parameter init, matching the module's __init__:
    gamma = jnp.ones((1, C, 1, 1), jnp.float32)
    beta = jnp.zeros((1, C, 1, 1), jnp.float32)
    moving_mean = jnp.zeros((1, C, 1, 1), jnp.float32)
    moving_var = jnp.ones((1, C, 1, 1), jnp.float32)

    # --- Fused single-pass path (the demo shape fits in VMEM). ---
    y, new_mm, new_mv = batch_norm_pallas(x, gamma, beta, moving_mean,
                                          moving_var)
    jax.block_until_ready((y, new_mm, new_mv))

    y_ref, mm_ref, mv_ref = batch_norm_ref(x, gamma, beta, moving_mean,
                                           moving_var)
    assert jnp.allclose(y, y_ref, atol=1e-4, rtol=1e-4), \
        float(jnp.max(jnp.abs(y - y_ref)))
    assert jnp.allclose(new_mm, mm_ref, atol=1e-5, rtol=1e-5)
    assert jnp.allclose(new_mv, mv_ref, atol=1e-5, rtol=1e-5)

    # --- Tiled two-pass path (forced small tiles so the grid/accumulator
    #     logic is exercised: 32 rows -> 4 row tiles, HW=1024 -> 4 lane tiles).
    N2, C2, H2, W2 = 4, 8, 32, 32
    x2 = jax.random.uniform(jax.random.PRNGKey(1), (N2, C2, H2, W2),
                            dtype=jnp.float32)
    g2 = jnp.full((1, C2, 1, 1), 1.5, jnp.float32)
    b2 = jnp.full((1, C2, 1, 1), -0.25, jnp.float32)
    mm2 = jnp.zeros((1, C2, 1, 1), jnp.float32)
    mv2 = jnp.ones((1, C2, 1, 1), jnp.float32)

    y2, nmm2, nmv2 = batch_norm_pallas(x2, g2, b2, mm2, mv2,
                                       force_tiled=True,
                                       tile_rows=8, tile_hw=256)
    jax.block_until_ready((y2, nmm2, nmv2))
    y2_ref, mm2_ref, mv2_ref = batch_norm_ref(x2, g2, b2, mm2, mv2)
    assert jnp.allclose(y2, y2_ref, atol=1e-4, rtol=1e-4), \
        float(jnp.max(jnp.abs(y2 - y2_ref)))
    assert jnp.allclose(nmm2, mm2_ref, atol=1e-5, rtol=1e-5)
    assert jnp.allclose(nmv2, mv2_ref, atol=1e-5, rtol=1e-5)

    print("KERNEL_OK")
</pallas_src>

<mosaic_0001>
module attributes {stable_mosaic.version = 11 : i64} {
  func.func @_bn_fused_kernel(%arg0: memref<2x4x256xf32, #tpu.memory_space<vmem>>, %arg1: memref<4x1xf32, #tpu.memory_space<vmem>>, %arg2: memref<4x1xf32, #tpu.memory_space<vmem>>, %arg3: memref<4x1xf32, #tpu.memory_space<vmem>>, %arg4: memref<4x1xf32, #tpu.memory_space<vmem>>, %arg5: memref<2x4x256xf32, #tpu.memory_space<vmem>>, %arg6: memref<4x1xf32, #tpu.memory_space<vmem>>, %arg7: memref<4x1xf32, #tpu.memory_space<vmem>>) attributes {dimension_semantics = [], scalar_prefetch = 0 : i64, scratch_operands = 0 : i64, tpu.core_type = #tpu.core_type<tc>} {
    %c0 = arith.constant 0 : index
    %c0_0 = arith.constant 0 : index
    %c0_1 = arith.constant 0 : index
    %0 = vector.load %arg0[%c0, %c0_0, %c0_1] : memref<2x4x256xf32, #tpu.memory_space<vmem>>, vector<2x4x256xf32>
    %cst = arith.constant dense<0.000000e+00> : vector<4xf32>
    %1 = vector.multi_reduction <add>, %0, %cst [0, 2] : vector<2x4x256xf32> to vector<4xf32>
    %2 = vector.shape_cast %1 : vector<4xf32> to vector<1x4x1xf32>
    %cst_2 = arith.constant 5.120000e+02 : f32
    %3 = vector.broadcast %cst_2 : f32 to vector<1x4x1xf32>
    %4 = arith.divf %2, %3 : vector<1x4x1xf32>
    %5 = vector.broadcast %4 : vector<1x4x1xf32> to vector<2x4x256xf32>
    %6 = arith.subf %0, %5 : vector<2x4x256xf32>
    %7 = arith.mulf %6, %6 : vector<2x4x256xf32>
    %cst_3 = arith.constant dense<0.000000e+00> : vector<4xf32>
    %8 = vector.multi_reduction <add>, %7, %cst_3 [0, 2] : vector<2x4x256xf32> to vector<4xf32>
    %9 = vector.shape_cast %8 : vector<4xf32> to vector<1x4x1xf32>
    %cst_4 = arith.constant 5.120000e+02 : f32
    %10 = vector.broadcast %cst_4 : f32 to vector<1x4x1xf32>
    %11 = arith.divf %9, %10 : vector<1x4x1xf32>
    %c0_5 = arith.constant 0 : index
    %c0_6 = arith.constant 0 : index
    %12 = vector.load %arg1[%c0_5, %c0_6] : memref<4x1xf32, #tpu.memory_space<vmem>>, vector<4x1xf32>
    %13 = vector.shape_cast %12 : vector<4x1xf32> to vector<1x4x1xf32>
    %c0_7 = arith.constant 0 : index
    %c0_8 = arith.constant 0 : index
    %14 = vector.load %arg2[%c0_7, %c0_8] : memref<4x1xf32, #tpu.memory_space<vmem>>, vector<4x1xf32>
    %15 = vector.shape_cast %14 : vector<4x1xf32> to vector<1x4x1xf32>
    %cst_9 = arith.constant 9.99999974E-6 : f32
    %16 = vector.broadcast %cst_9 : f32 to vector<1x4x1xf32>
    %17 = arith.addf %11, %16 : vector<1x4x1xf32>
    %18 = math.rsqrt %17 : vector<1x4x1xf32>
    %19 = arith.mulf %13, %18 : vector<1x4x1xf32>
    %20 = arith.mulf %4, %19 : vector<1x4x1xf32>
    %21 = arith.subf %15, %20 : vector<1x4x1xf32>
    %22 = vector.broadcast %19 : vector<1x4x1xf32> to vector<2x4x256xf32>
    %23 = arith.mulf %0, %22 : vector<2x4x256xf32>
    %24 = vector.broadcast %21 : vector<1x4x1xf32> to vector<2x4x256xf32>
    %25 = arith.addf %23, %24 : vector<2x4x256xf32>
    %c0_10 = arith.constant 0 : index
    %c0_11 = arith.constant 0 : index
    %c0_12 = arith.constant 0 : index
    %26 = vector.load %arg5[%c0_10, %c0_11, %c0_12] : memref<2x4x256xf32, #tpu.memory_space<vmem>>, vector<2x4x256xf32>
    tpu.vector_store %arg5[%c0_10, %c0_11, %c0_12], %25 {strides = array<i32>} : memref<2x4x256xf32, #tpu.memory_space<vmem>>, vector<2x4x256xf32>,
    %c0_13 = arith.constant 0 : index
    %c0_14 = arith.constant 0 : index
    %27 = vector.load %arg3[%c0_13, %c0_14] : memref<4x1xf32, #tpu.memory_space<vmem>>, vector<4x1xf32>
    %cst_15 = arith.constant 0.899999976 : f32
    %28 = vector.broadcast %cst_15 : f32 to vector<4x1xf32>
    %29 = arith.mulf %28, %27 : vector<4x1xf32>
    %30 = vector.shape_cast %4 : vector<1x4x1xf32> to vector<4x1xf32>
    %cst_16 = arith.constant 1.000000e-01 : f32
    %31 = vector.broadcast %cst_16 : f32 to vector<4x1xf32>
    %32 = arith.mulf %31, %30 : vector<4x1xf32>
    %33 = arith.addf %29, %32 : vector<4x1xf32>
    %c0_17 = arith.constant 0 : index
    %c0_18 = arith.constant 0 : index
    %34 = vector.load %arg6[%c0_17, %c0_18] : memref<4x1xf32, #tpu.memory_space<vmem>>, vector<4x1xf32>
    tpu.vector_store %arg6[%c0_17, %c0_18], %33 {strides = array<i32>} : memref<4x1xf32, #tpu.memory_space<vmem>>, vector<4x1xf32>,
    %c0_19 = arith.constant 0 : index
    %c0_20 = arith.constant 0 : index
    %35 = vector.load %arg4[%c0_19, %c0_20] : memref<4x1xf32, #tpu.memory_space<vmem>>, vector<4x1xf32>
    %cst_21 = arith.constant 0.899999976 : f32
    %36 = vector.broadcast %cst_21 : f32 to vector<4x1xf32>
    %37 = arith.mulf %36, %35 : vector<4x1xf32>
    %38 = vector.shape_cast %11 : vector<1x4x1xf32> to vector<4x1xf32>
    %cst_22 = arith.constant 1.000000e-01 : f32
    %39 = vector.broadcast %cst_22 : f32 to vector<4x1xf32>
    %40 = arith.mulf %39, %38 : vector<4x1xf32>
    %41 = arith.addf %37, %40 : vector<4x1xf32>
    %c0_23 = arith.constant 0 : index
    %c0_24 = arith.constant 0 : index
    %42 = vector.load %arg7[%c0_23, %c0_24] : memref<4x1xf32, #tpu.memory_space<vmem>>, vector<4x1xf32>
    tpu.vector_store %arg7[%c0_23, %c0_24], %41 {strides = array<i32>} : memref<4x1xf32, #tpu.memory_space<vmem>>, vector<4x1xf32>,
    return
  }
}

</mosaic_0001>

<llo_original>
// kernel: tpu_custom_call.1
$region0: #{tpu_custom_call.1}
  #allocation0 [shape = 'u32[]', space=smem, size = 0x4, offset = 0x4, fixed_abs, tag = 'smem constant byte address 0x4 - core index']
  #allocation1 [shape = 'u32[144,128]{1,0:T(1,128)}', space=vmem, size = 0x12000, scoped, tag = 'internal scratch']
  %s0 = inlined_call_operand.vmem [shape: f32[2,4,256], index: 0, kind: input, shape index: {}]
  %s1 = inlined_call_operand.vmem [shape: f32[4,1], index: 1, kind: input, shape index: {}]
  %s2 = inlined_call_operand.vmem [shape: f32[4,1], index: 2, kind: input, shape index: {}]
  %s3 = inlined_call_operand.vmem [shape: f32[4,1], index: 3, kind: input, shape index: {}]
  %s4 = inlined_call_operand.vmem [shape: f32[4,1], index: 4, kind: input, shape index: {}]
  %s5 = inlined_call_operand.hbm [shape: f32[2,4,256], index: 5, kind: output, shape index: {0}]
  %s6 = inlined_call_operand.vmem [shape: f32[4,1], index: 6, kind: output, shape index: {1}]
  %s7 = inlined_call_operand.vmem [shape: f32[4,1], index: 7, kind: output, shape index: {2}]
  %8 = xla_tuple %s5, %s6, %s7
  %s9 = sld [smem:[#allocation0]]
  $region46: #{tpu_custom_call.1} parent=0
    _
  %s11 = ssub.s32 1, %s9
  %s12 = scalar_select 0, %s11, %s9
  $region1: #{tpu_custom_call.1} parent=0
    #allocation2 [shape = 'u8[8192]{0}', space=vmem, size = 0x2000, scoped, tag = 'output window, operand 0, single buffered']
    #allocation3 [shape = 's32[1]{0}', space=sflag, size = 0x4, scoped, tag = 'scoped memory for tpu_custom_call.1']
    %13 = vsyncpa [#allocation3], 0
    // Predicated region
    $region2: #{tpu_custom_call.1} parent=1 // pred_check
      _
    $region3: #{tpu_custom_call.1} parent=1 // pred_check_branch
      %15 = sbr.rel (0) target = $region5
    $region4: #{tpu_custom_call.1} parent=1 // pred_region
      _
    $region5: #{tpu_custom_call.1} parent=1 // pred_fallthru
      _
    // Predicated region
    $region6: #{tpu_custom_call.1} parent=1 // pred_check
      _
    $region7: #{tpu_custom_call.1} parent=1 // pred_check_branch
      %17 = sbr.rel (0) target = $region9
    $region8: #{tpu_custom_call.1} parent=1 // pred_region
      _
    $region9: #{tpu_custom_call.1} parent=1 // pred_fallthru
      _
    // Predicated region
    $region10: #{tpu_custom_call.1} parent=1 // pred_check
      _
    $region11: #{tpu_custom_call.1} parent=1 // pred_check_branch
      %19 = sbr.rel (0) target = $region13
    $region12: #{tpu_custom_call.1} parent=1 // pred_region
      _
    $region13: #{tpu_custom_call.1} parent=1 // pred_fallthru
      _
    // Predicated region
    $region14: #{tpu_custom_call.1} parent=1 // pred_check
      _
    $region15: #{tpu_custom_call.1} parent=1 // pred_check_branch
      %21 = sbr.rel (0) target = $region17
    $region16: #{tpu_custom_call.1} parent=1 // pred_region
      _
    $region17: #{tpu_custom_call.1} parent=1 // pred_fallthru
      _
    // Predicated region
    $region18: #{tpu_custom_call.1} parent=1 // pred_check
      _
    $region19: #{tpu_custom_call.1} parent=1 // pred_check_branch
      %23 = sbr.rel (0) target = $region21
    $region20: #{tpu_custom_call.1} parent=1 // pred_region
      _
    $region21: #{tpu_custom_call.1} parent=1 // pred_fallthru
      _
    %v24 = vld [vmem:[%s0] sm:$0xff]
    %v25 = vld [vmem:[%s0 + $0x8] sm:$0xff]
    %v28 = vcombine.high %v24, %v24
    %v29 = vcombine.high %v25, %v25
    %vm32 = vcmask 1043456
    %v33 = vsel %vm32, %v24, 0.0
    %v34 = vsel %vm32, %v28, 0.0
    %v35 = vadd.f32 %v33, %v34
    %v36 = vsel %vm32, %v25, 0.0
    %v37 = vadd.f32 %v35, %v36
    %v38 = vsel %vm32, %v29, 0.0
    %v39 = vadd.f32 %v37, %v38
    %40 = vadd.xlane.f32.xlu0 %v39
    %v41 = vpop.xlane.xlu0 %40
    %v42 = vrcp.pop 512.0
    %v43 = vmul.f32 %v41, %v42
    %v46 = vunpack.c.l.s4 839922192
    %v47 = vunpack.c.0.s8 %v46
    %v48 = vlaneseq
    %v49 = vshrl.u32 %v48, 7
    %v50 = vsub.s32 %v47, %v49
    %v51 = vrot.slane %v43, %v50
    %v53 = vsub.f32 %v24, %v51
    %v54 = vsub.f32 %v25, %v51
    %v55 = vmul.f32 %v53, %v53
    %v56 = vmul.f32 %v54, %v54
    %v59 = vcombine.high %v55, %v55
    %v60 = vcombine.high %v56, %v56
    %v63 = vsel %vm32, %v55, 0.0
    %v64 = vsel %vm32, %v59, 0.0
    %v65 = vadd.f32 %v63, %v64
    %v66 = vsel %vm32, %v56, 0.0
    %v67 = vadd.f32 %v65, %v66
    %v68 = vsel %vm32, %v60, 0.0
    %v69 = vadd.f32 %v67, %v68
    %70 = vadd.xlane.f32.xlu0 %v69
    %v71 = vpop.xlane.xlu0 %70
    %v72 = vmul.f32 %v71, %v42
    %v73 = vld [vmem:[%s1] sm:$0xf]
    %v74 = vld [vmem:[%s2] sm:$0xf]
    %v75 = vadd.f32 %v72, 1e-05
    %v76 = vrsqrt.pop %v75
    %v77 = vmul.f32 %v73, %v76
    %v78 = vmul.f32 %v43, %v77
    %v79 = vsub.f32 %v74, %v78
    %81 = vset.pattern.permute.xlu0 0
    %82 = vperm.xlu0 %81, %v77
    %v83 = vpop.permute.xlu0 %82
    %v85 = vunpack.c.l.s4 839922192
    %v86 = vunpack.c.0.s8 %v85
    %v87 = vlaneseq
    %v88 = vshrl.u32 %v87, 7
    %v89 = vsub.s32 %v86, %v88
    %v90 = vrot.slane %v83, %v89
    %v92 = vmul.f32 %v24, %v90
    %v93 = vmul.f32 %v25, %v90
    %95 = vset.pattern.permute.xlu0 0
    %96 = vperm.xlu0 %95, %v79
    %v97 = vpop.permute.xlu0 %96
    %v99 = vunpack.c.l.s4 839922192
    %v100 = vunpack.c.0.s8 %v99
    %v101 = vlaneseq
    %v102 = vshrl.u32 %v101, 7
    %v103 = vsub.s32 %v100, %v102
    %v104 = vrot.slane %v97, %v103
    %v106 = vadd.f32 %v92, %v104
    %v107 = vadd.f32 %v93, %v104
    %108 = vst [vmem:[#allocation2] sm:$0xff] %v106
    %109 = vst [vmem:[#allocation2 + $0x8] sm:$0xff] %v107
    %v110 = vld [vmem:[%s3] sm:$0xf]
    %v111 = vmul.f32 %v110, 0.9
    %v112 = vmul.f32 %v43, 0.1
    %v113 = vadd.f32 %v111, %v112
    %vm114 = vcmask 3072
    %115 = vst.msk [vmem:[%s6] sm:$0xf] %vm114, %v113
    %v116 = vld [vmem:[%s4] sm:$0xf]
    %v117 = vmul.f32 %v116, 0.9
    %v118 = vmul.f32 %v72, 0.1
    %v119 = vadd.f32 %v117, %v118
    %120 = vst.msk [vmem:[%s7] sm:$0xf] %vm114, %v119
    // Predicated region
    $region22: #{tpu_custom_call.1} parent=1 // pred_check
      _
    $region23: #{tpu_custom_call.1} parent=1 // pred_check_branch
      %122 = sbr.rel (0) target = $region25
    $region24: #{tpu_custom_call.1} parent=1 // pred_region
      %s124 = ssub.s32 256, 256
      %125 = vsyncadd [#allocation3], %s124
      %s126 = sshll.u32 [#allocation2], 4
      %s127 = int_to_ptr.vmem [resolvable:$true] %s126
      %132 = dma.vmem_to_hbm [thread:$0]  %s127, 256, %s5, [#allocation3], 128, 128, 8
    $region25: #{tpu_custom_call.1} parent=1 // pred_fallthru
      _
    // Predicated region
    $region26: #{tpu_custom_call.1} parent=1 // pred_check
      _
    $region27: #{tpu_custom_call.1} parent=1 // pred_check_branch
      %134 = sbr.rel (0) target = $region29
    $region28: #{tpu_custom_call.1} parent=1 // pred_region
      _
    $region29: #{tpu_custom_call.1} parent=1 // pred_fallthru
      _
    // Predicated region
    $region30: #{tpu_custom_call.1} parent=1 // pred_check
      _
    $region31: #{tpu_custom_call.1} parent=1 // pred_check_branch
      %136 = sbr.rel (0) target = $region33
    $region32: #{tpu_custom_call.1} parent=1 // pred_region
      _
    $region33: #{tpu_custom_call.1} parent=1 // pred_fallthru
      _
    // Predicated region
    $region34: #{tpu_custom_call.1} parent=1 // pred_check
      _
    $region35: #{tpu_custom_call.1} parent=1 // pred_check_branch
      %138 = sbr.rel (0) target = $region37
    $region36: #{tpu_custom_call.1} parent=1 // pred_region
      %139 = dma.done [#allocation3], 256
    $region37: #{tpu_custom_call.1} parent=1 // pred_fallthru
      _
    // Predicated region
    $region38: #{tpu_custom_call.1} parent=1 // pred_check
      _
    $region39: #{tpu_custom_call.1} parent=1 // pred_check_branch
      %141 = sbr.rel (0) target = $region41
    $region40: #{tpu_custom_call.1} parent=1 // pred_region
      _
    $region41: #{tpu_custom_call.1} parent=1 // pred_fallthru
      _
    // Predicated region
    $region42: #{tpu_custom_call.1} parent=1 // pred_check
      _
    $region43: #{tpu_custom_call.1} parent=1 // pred_check_branch
      %143 = sbr.rel (0) target = $region45
    $region44: #{tpu_custom_call.1} parent=1 // pred_region
      _
    $region45: #{tpu_custom_call.1} parent=1 // pred_fallthru
      _
    %144 = vsyncpa [#allocation3], 1

</llo_original>
